<compile_context>
chip_gen: v7x
topology: tpu7x:2x2x1
jax: 0.10.0
libtpu: 0.0.40
codegen_flags: <defaults>
</compile_context>

<pallas_src>
import functools

import jax
import jax.numpy as jnp
from jax import lax
from jax.experimental import pallas as pl
from jax.experimental.pallas import tpu as pltpu

HUBER_DELTA = 1.0          # nn.HuberLoss default
BCE_LOG_CLAMP = -100.0     # PyTorch BCELoss clamps log terms at -100
_LANES = 128


def _round_up(x, m):
    return -(-x // m) * m


def _huber_elem(d):
    a = jnp.abs(d)
    return jnp.where(a <= HUBER_DELTA,
                     0.5 * d * d,
                     HUBER_DELTA * (a - 0.5 * HUBER_DELTA))


def _criterion_kernel(x_ref, t_ref, out_ref, *, tn, rem, grid_n, iou_threshold):
    # x_ref  : (5, P, TN) predictions, native dtype. lanes = samples, sublanes = boxes.
    # t_ref  : (5, 1, TN) per-sample ground truth, native dtype.
    # out_ref: (1, 2, 128) f32. row 0 = huber element-sum, row 1 = bce element-sum.
    i = pl.program_id(0)

    # Per-plane upcast on the VPU (no full-block f32 copy; loads near use).
    pc = x_ref[0].astype(jnp.float32)      # (P, TN) confidence
    px = x_ref[1].astype(jnp.float32)
    py = x_ref[2].astype(jnp.float32)
    pw = x_ref[3].astype(jnp.float32)
    ph = x_ref[4].astype(jnp.float32)

    gc = t_ref[0].astype(jnp.float32)      # (1, TN): broadcast across sublanes (P)
    gx = t_ref[1].astype(jnp.float32)
    gy = t_ref[2].astype(jnp.float32)
    gw = t_ref[3].astype(jnp.float32)
    gh = t_ref[4].astype(jnp.float32)

    # ---- IoU (parity with compute_iou: no u_area==0 guard, i_area unclamped) ----
    x_left = jnp.maximum(px, gx)
    y_top = jnp.maximum(py, gy)
    x_right = jnp.minimum(px + pw, gx + gw)
    y_bottom = jnp.minimum(py + ph, gy + gh)
    i_area = (x_right - x_left) * (y_bottom - y_top)
    u_area = pw * ph + gw * gh - i_area
    # NOTE: pl.reciprocal(u_area, approx=True) would move the divide onto the
    # EUP slot, but approximate reciprocal can flip borderline IoU-vs-threshold
    # decisions; keep the exact divide for bit-level parity.
    ious = i_area / u_area
    ious = jnp.where(x_right < x_left, 0.0, ious)
    ious = jnp.where(y_bottom < y_top, 0.0, ious)
    invalid = ious < iou_threshold         # (P, TN); NaN IoU -> False (gt kept)

    # ---- Huber(delta=1): invalid mask folded into residuals, per-channel acc ----
    # invalid => gt box zeroed => residual is just the prediction.
    h = _huber_elem(jnp.where(invalid, px, px - gx))
    h = h + _huber_elem(jnp.where(invalid, py, py - gy))
    h = h + _huber_elem(jnp.where(invalid, pw, pw - gw))
    h = h + _huber_elem(jnp.where(invalid, ph, ph - gh))

    # ---- BCE on confidence (PyTorch log clamping), invalid mask folded in ----
    log_p = jnp.maximum(jnp.log(pc), BCE_LOG_CLAMP)
    log_1mp = jnp.maximum(jnp.log(1.0 - pc), BCE_LOG_CLAMP)
    bce = jnp.where(invalid, -log_1mp, -(gc * log_p + (1.0 - gc) * log_1mp))

    def _store(h_sum, b_sum):
        # Single lane-dense unmasked store of both partial sums.
        row = lax.broadcasted_iota(jnp.int32, (1, 2, _LANES), 1)
        out_ref[...] = jnp.where(row == 0, h_sum, b_sum)

    if rem:  # static: last grid step covers a ragged block -> mask only there
        last = grid_n - 1

        @pl.when(i == last)
        def _():
            lane = lax.broadcasted_iota(jnp.int32, (1, tn), 1)
            valid = lane < rem                       # (1, TN), broadcast over P
            _store(jnp.sum(jnp.where(valid, h, 0.0)),
                   jnp.sum(jnp.where(valid, bce, 0.0)))

        @pl.when(i != last)
        def _():
            _store(jnp.sum(h), jnp.sum(bce))
    else:
        _store(jnp.sum(h), jnp.sum(bce))


def _choose_tile_n(n, p, itemsize):
    """Lane tile (multiple of 128) targeting ~8 MiB/input block and >=2 grid steps."""
    if n <= 128:
        return n                       # one full-extent block (block dim == array dim)
    target_bytes = 8 * 1024 * 1024     # v5e/v6e: amortize per-step overhead
    p_pad = _round_up(p, 8)
    tn = (target_bytes // max(1, 5 * p_pad * itemsize)) // 128 * 128
    tn = max(128, min(int(tn), 32768))
    # Keep >=2 grid steps so dimension_semantics=("parallel",) can engage both
    # v7x TensorCores.
    half = _round_up(-(-n // 2), 128)
    return max(128, min(tn, half))


def gw_detection_criterion(inputs, targets, iou_threshold=0.5, tile_n=None):
    """inputs: (N, P, 5), targets: (N, 5) -> (bbox_loss, conf_loss) f32 scalars."""
    n, p, b = inputs.shape
    assert b == 5 and targets.shape == (n, 5)
    itemsize = jnp.dtype(inputs.dtype).itemsize
    t_itemsize = jnp.dtype(targets.dtype).itemsize

    if tile_n is None:
        tn = _choose_tile_n(n, p, itemsize)
    else:
        tn = min(int(tile_n), n)
        if tn < n:
            tn = max(128, (tn // 128) * 128)   # lane tiles must be 128-aligned
            if tn >= n:
                tn = n
    grid_n = -(-n // tn)
    rem = n % tn                               # 0 -> no masking codegen at all

    # Lane axis = N (full lane occupancy for any P), sublane axis = P.
    # No jnp.pad pass: the ragged last block is masked in-kernel.
    # TODO(synk): if the producer can emit (5, P, N) (and/or bf16) directly,
    # this transpose (one extra HBM read+write pass) disappears entirely.
    x = jnp.transpose(inputs, (2, 1, 0))             # (5, P, N)
    t = jnp.transpose(targets, (1, 0))[:, None, :]   # (5, 1, N)

    kernel = functools.partial(_criterion_kernel, tn=tn, rem=rem,
                               grid_n=grid_n,
                               iou_threshold=float(iou_threshold))

    # VMEM budget from the *padded* footprint (sublane -> mult of 8) plus an
    # estimate of the live f32 working planes; cap under v7x's 64 MiB.
    p_pad = _round_up(p, 8)
    in_block = 5 * p_pad * tn * itemsize
    tgt_block = 5 * 8 * tn * t_itemsize
    work_f32 = 12 * p_pad * tn * 4
    vmem_bytes = 2 * in_block + 2 * tgt_block + work_f32 + 4 * 2 * _LANES * 4
    vmem_limit = int(min(48 * 2**20, max(16 * 2**20, vmem_bytes + (4 << 20))))

    cost = pl.CostEstimate(
        flops=int(40 * n * p),
        transcendentals=int(2 * n * p),
        bytes_accessed=int(n * p * 5 * itemsize + n * 5 * t_itemsize
                           + grid_n * 2 * _LANES * 4),
    )

    part = pl.pallas_call(
        kernel,
        grid=(grid_n,),
        out_shape=jax.ShapeDtypeStruct((grid_n, 2, _LANES), jnp.float32),
        in_specs=[
            pl.BlockSpec((5, p, tn), lambda i: (0, 0, i)),
            pl.BlockSpec((5, 1, tn), lambda i: (0, 0, i)),
        ],
        out_specs=pl.BlockSpec((1, 2, _LANES), lambda i: (i, 0, 0)),
        compiler_params=pltpu.CompilerParams(
            dimension_semantics=("parallel",),
            vmem_limit_bytes=vmem_limit,
        ),
        cost_estimate=cost,
    )(x, t)

    # Cross-block reduction + normalization. sum-of-per-sample-means / N equals
    # the global mean only because every sample has the same P (see header).
    bbox_loss = jnp.sum(part[:, 0, 0]) / jnp.float32(n * p * 4)
    conf_loss = jnp.sum(part[:, 1, 0]) / jnp.float32(n * p)
    return bbox_loss, conf_loss


def _reference(inputs, targets, iou_threshold=0.5):
    """Vectorized pure-JAX mirror of the PyTorch forward, for a sanity check."""
    inputs = inputs.astype(jnp.float32)
    targets = targets.astype(jnp.float32)
    n, p, _ = inputs.shape
    pc = inputs[..., 0]
    pb = inputs[..., 1:]
    gt = jnp.broadcast_to(targets[:, None, :], (n, p, 5))
    gc = gt[..., 0]
    gb = gt[..., 1:]
    x1, y1, w1, h1 = (pb[..., k] for k in range(4))
    x2, y2, w2, h2 = (gb[..., k] for k in range(4))
    xl = jnp.maximum(x1, x2)
    yt = jnp.maximum(y1, y2)
    xr = jnp.minimum(x1 + w1, x2 + w2)
    yb = jnp.minimum(y1 + h1, y2 + h2)
    ia = (xr - xl) * (yb - yt)
    ua = w1 * h1 + w2 * h2 - ia
    iou = ia / ua
    iou = jnp.where(xr < xl, 0.0, iou)
    iou = jnp.where(yb < yt, 0.0, iou)
    invalid = iou < iou_threshold
    gb = jnp.where(invalid[..., None], 0.0, gb)
    gc = jnp.where(invalid, 0.0, gc)
    d = pb - gb
    a = jnp.abs(d)
    hub = jnp.where(a <= 1.0, 0.5 * d * d, a - 0.5)
    bbox = jnp.mean(hub.reshape(n, -1), axis=1)
    lp = jnp.maximum(jnp.log(pc), BCE_LOG_CLAMP)
    l1p = jnp.maximum(jnp.log(1.0 - pc), BCE_LOG_CLAMP)
    conf = jnp.mean(-(gc * lp + (1.0 - gc) * l1p), axis=1)
    return jnp.sum(bbox) / n, jnp.sum(conf) / n


def _make_inputs(key, n, p):
    k1, k2, k3, k4 = jax.random.split(key, 4)
    pred_conf = jax.nn.sigmoid(jax.random.normal(k1, (n, p, 1)))
    pred_boxes = jax.random.uniform(k2, (n, p, 4), minval=0.0, maxval=1.0)
    inputs = jnp.concatenate([pred_conf, pred_boxes], axis=-1).astype(jnp.float32)
    tgt_conf = jax.random.uniform(k3, (n, 1), minval=0.0, maxval=1.0)
    tgt_boxes = jax.random.uniform(k4, (n, 4), minval=0.0, maxval=1.0)
    targets = jnp.concatenate([tgt_conf, tgt_boxes], axis=-1).astype(jnp.float32)
    return inputs, targets


def _check(got, want, name):
    gb, gc = got
    wb, wc = want
    assert jnp.allclose(gb, wb, rtol=1e-4, atol=1e-5), (name, gb, wb)
    assert jnp.allclose(gc, wc, rtol=1e-4, atol=1e-5), (name, gc, wc)


if __name__ == "__main__":
    key = jax.random.PRNGKey(0)
    k_a, k_b, k_c = jax.random.split(key, 3)

    # Case 1: module-sized small example (N=2 samples, P=8 predicted boxes).
    inp1, tgt1 = _make_inputs(k_a, 2, 8)
    out1 = gw_detection_criterion(inp1, tgt1)
    jax.block_until_ready(out1)
    _check(out1, _reference(inp1, tgt1), "case1")

    # Case 2: N not a multiple of 8 -> single full-extent block (tn = N).
    inp2, tgt2 = _make_inputs(k_b, 11, 8)
    out2 = gw_detection_criterion(inp2, tgt2)
    jax.block_until_ready(out2)
    _check(out2, _reference(inp2, tgt2), "case2")

    # Case 3: forced 128-lane tiles -> 3 grid steps, ragged last block (300 = 128+128+44).
    inp3, tgt3 = _make_inputs(k_c, 300, 8)
    out3 = gw_detection_criterion(inp3, tgt3, tile_n=128)
    jax.block_until_ready(out3)
    ref3 = _reference(inp3, tgt3)
    _check(out3, ref3, "case3")

    # Case 4: auto tile on the same data -> 2 grid steps (256 + ragged 44).
    out4 = gw_detection_criterion(inp3, tgt3)
    jax.block_until_ready(out4)
    _check(out4, ref3, "case4")

    print("KERNEL_OK")
</pallas_src>

<mosaic_0001>
module attributes {stable_mosaic.version = 11 : i64} {
  func.func @_criterion_kernel(%arg0: i32, %arg1: memref<5x8x2xf32, #tpu.memory_space<vmem>>, %arg2: memref<5x1x2xf32, #tpu.memory_space<vmem>>, %arg3: memref<1x2x128xf32, #tpu.memory_space<vmem>>) attributes {dimension_semantics = [#tpu.dimension_semantics<parallel>], iteration_bounds = array<i64: 1>, scalar_prefetch = 0 : i64, scratch_operands = 0 : i64, tpu.core_type = #tpu.core_type<tc>, window_params = [{transform_indices = @transform_0, window_bounds = array<i64: 5, 8, 2>}, {transform_indices = @transform_1, window_bounds = array<i64: 5, 1, 2>}, {transform_indices = @transform_2, window_bounds = array<i64: 1, 2, 128>}]} {
    %c0 = arith.constant 0 : index
    %c0_0 = arith.constant 0 : index
    %c0_1 = arith.constant 0 : index
    %0 = vector.load %arg1[%c0, %c0_0, %c0_1] : memref<5x8x2xf32, #tpu.memory_space<vmem>>, vector<1x8x2xf32>
    %1 = vector.shape_cast %0 : vector<1x8x2xf32> to vector<8x2xf32>
    %c1 = arith.constant 1 : index
    %c0_2 = arith.constant 0 : index
    %c0_3 = arith.constant 0 : index
    %2 = vector.load %arg1[%c1, %c0_2, %c0_3] : memref<5x8x2xf32, #tpu.memory_space<vmem>>, vector<1x8x2xf32>
    %3 = vector.shape_cast %2 : vector<1x8x2xf32> to vector<8x2xf32>
    %c2 = arith.constant 2 : index
    %c0_4 = arith.constant 0 : index
    %c0_5 = arith.constant 0 : index
    %4 = vector.load %arg1[%c2, %c0_4, %c0_5] : memref<5x8x2xf32, #tpu.memory_space<vmem>>, vector<1x8x2xf32>
    %5 = vector.shape_cast %4 : vector<1x8x2xf32> to vector<8x2xf32>
    %c3 = arith.constant 3 : index
    %c0_6 = arith.constant 0 : index
    %c0_7 = arith.constant 0 : index
    %6 = vector.load %arg1[%c3, %c0_6, %c0_7] : memref<5x8x2xf32, #tpu.memory_space<vmem>>, vector<1x8x2xf32>
    %7 = vector.shape_cast %6 : vector<1x8x2xf32> to vector<8x2xf32>
    %c4 = arith.constant 4 : index
    %c0_8 = arith.constant 0 : index
    %c0_9 = arith.constant 0 : index
    %8 = vector.load %arg1[%c4, %c0_8, %c0_9] : memref<5x8x2xf32, #tpu.memory_space<vmem>>, vector<1x8x2xf32>
    %9 = vector.shape_cast %8 : vector<1x8x2xf32> to vector<8x2xf32>
    %c0_10 = arith.constant 0 : index
    %c0_11 = arith.constant 0 : index
    %c0_12 = arith.constant 0 : index
    %10 = vector.load %arg2[%c0_10, %c0_11, %c0_12] : memref<5x1x2xf32, #tpu.memory_space<vmem>>, vector<1x1x2xf32>
    %11 = vector.shape_cast %10 : vector<1x1x2xf32> to vector<1x2xf32>
    %c1_13 = arith.constant 1 : index
    %c0_14 = arith.constant 0 : index
    %c0_15 = arith.constant 0 : index
    %12 = vector.load %arg2[%c1_13, %c0_14, %c0_15] : memref<5x1x2xf32, #tpu.memory_space<vmem>>, vector<1x1x2xf32>
    %13 = vector.shape_cast %12 : vector<1x1x2xf32> to vector<1x2xf32>
    %c2_16 = arith.constant 2 : index
    %c0_17 = arith.constant 0 : index
    %c0_18 = arith.constant 0 : index
    %14 = vector.load %arg2[%c2_16, %c0_17, %c0_18] : memref<5x1x2xf32, #tpu.memory_space<vmem>>, vector<1x1x2xf32>
    %15 = vector.shape_cast %14 : vector<1x1x2xf32> to vector<1x2xf32>
    %c3_19 = arith.constant 3 : index
    %c0_20 = arith.constant 0 : index
    %c0_21 = arith.constant 0 : index
    %16 = vector.load %arg2[%c3_19, %c0_20, %c0_21] : memref<5x1x2xf32, #tpu.memory_space<vmem>>, vector<1x1x2xf32>
    %17 = vector.shape_cast %16 : vector<1x1x2xf32> to vector<1x2xf32>
    %c4_22 = arith.constant 4 : index
    %c0_23 = arith.constant 0 : index
    %c0_24 = arith.constant 0 : index
    %18 = vector.load %arg2[%c4_22, %c0_23, %c0_24] : memref<5x1x2xf32, #tpu.memory_space<vmem>>, vector<1x1x2xf32>
    %19 = vector.shape_cast %18 : vector<1x1x2xf32> to vector<1x2xf32>
    %20 = vector.broadcast %13 : vector<1x2xf32> to vector<8x2xf32>
    %21 = arith.maximumf %3, %20 : vector<8x2xf32>
    %22 = vector.broadcast %15 : vector<1x2xf32> to vector<8x2xf32>
    %23 = arith.maximumf %5, %22 : vector<8x2xf32>
    %24 = arith.addf %3, %7 : vector<8x2xf32>
    %25 = arith.addf %13, %17 : vector<1x2xf32>
    %26 = vector.broadcast %25 : vector<1x2xf32> to vector<8x2xf32>
    %27 = arith.minimumf %24, %26 : vector<8x2xf32>
    %28 = arith.addf %5, %9 : vector<8x2xf32>
    %29 = arith.addf %15, %19 : vector<1x2xf32>
    %30 = vector.broadcast %29 : vector<1x2xf32> to vector<8x2xf32>
    %31 = arith.minimumf %28, %30 : vector<8x2xf32>
    %32 = arith.subf %27, %21 : vector<8x2xf32>
    %33 = arith.subf %31, %23 : vector<8x2xf32>
    %34 = arith.mulf %32, %33 : vector<8x2xf32>
    %35 = arith.mulf %7, %9 : vector<8x2xf32>
    %36 = arith.mulf %17, %19 : vector<1x2xf32>
    %37 = vector.broadcast %36 : vector<1x2xf32> to vector<8x2xf32>
    %38 = arith.addf %35, %37 : vector<8x2xf32>
    %39 = arith.subf %38, %34 : vector<8x2xf32>
    %40 = arith.divf %34, %39 : vector<8x2xf32>
    %41 = arith.cmpf olt, %27, %21 : vector<8x2xf32>
    %cst = arith.constant 0.000000e+00 : f32
    %42 = vector.broadcast %cst : f32 to vector<8x2xf32>
    %43 = arith.select %41, %42, %40 : vector<8x2xi1>, vector<8x2xf32>
    %44 = arith.cmpf olt, %31, %23 : vector<8x2xf32>
    %cst_25 = arith.constant 0.000000e+00 : f32
    %45 = vector.broadcast %cst_25 : f32 to vector<8x2xf32>
    %46 = arith.select %44, %45, %43 : vector<8x2xi1>, vector<8x2xf32>
    %cst_26 = arith.constant 5.000000e-01 : f32
    %47 = vector.broadcast %cst_26 : f32 to vector<8x2xf32>
    %48 = arith.cmpf olt, %46, %47 : vector<8x2xf32>
    %49 = vector.broadcast %13 : vector<1x2xf32> to vector<8x2xf32>
    %50 = arith.subf %3, %49 : vector<8x2xf32>
    %51 = arith.select %48, %3, %50 : vector<8x2xi1>, vector<8x2xf32>
    %52 = math.absf %51 : vector<8x2xf32>
    %cst_27 = arith.constant 1.000000e+00 : f32
    %53 = vector.broadcast %cst_27 : f32 to vector<8x2xf32>
    %54 = arith.cmpf ole, %52, %53 : vector<8x2xf32>
    %cst_28 = arith.constant 5.000000e-01 : f32
    %55 = vector.broadcast %cst_28 : f32 to vector<8x2xf32>
    %56 = arith.mulf %55, %51 : vector<8x2xf32>
    %57 = arith.mulf %56, %51 : vector<8x2xf32>
    %cst_29 = arith.constant 5.000000e-01 : f32
    %58 = vector.broadcast %cst_29 : f32 to vector<8x2xf32>
    %59 = arith.subf %52, %58 : vector<8x2xf32>
    %cst_30 = arith.constant 1.000000e+00 : f32
    %60 = vector.broadcast %cst_30 : f32 to vector<8x2xf32>
    %61 = arith.mulf %60, %59 : vector<8x2xf32>
    %62 = arith.select %54, %57, %61 : vector<8x2xi1>, vector<8x2xf32>
    %63 = vector.broadcast %15 : vector<1x2xf32> to vector<8x2xf32>
    %64 = arith.subf %5, %63 : vector<8x2xf32>
    %65 = arith.select %48, %5, %64 : vector<8x2xi1>, vector<8x2xf32>
    %66 = math.absf %65 : vector<8x2xf32>
    %cst_31 = arith.constant 1.000000e+00 : f32
    %67 = vector.broadcast %cst_31 : f32 to vector<8x2xf32>
    %68 = arith.cmpf ole, %66, %67 : vector<8x2xf32>
    %cst_32 = arith.constant 5.000000e-01 : f32
    %69 = vector.broadcast %cst_32 : f32 to vector<8x2xf32>
    %70 = arith.mulf %69, %65 : vector<8x2xf32>
    %71 = arith.mulf %70, %65 : vector<8x2xf32>
    %cst_33 = arith.constant 5.000000e-01 : f32
    %72 = vector.broadcast %cst_33 : f32 to vector<8x2xf32>
    %73 = arith.subf %66, %72 : vector<8x2xf32>
    %cst_34 = arith.constant 1.000000e+00 : f32
    %74 = vector.broadcast %cst_34 : f32 to vector<8x2xf32>
    %75 = arith.mulf %74, %73 : vector<8x2xf32>
    %76 = arith.select %68, %71, %75 : vector<8x2xi1>, vector<8x2xf32>
    %77 = arith.addf %62, %76 : vector<8x2xf32>
    %78 = vector.broadcast %17 : vector<1x2xf32> to vector<8x2xf32>
    %79 = arith.subf %7, %78 : vector<8x2xf32>
    %80 = arith.select %48, %7, %79 : vector<8x2xi1>, vector<8x2xf32>
    %81 = math.absf %80 : vector<8x2xf32>
    %cst_35 = arith.constant 1.000000e+00 : f32
    %82 = vector.broadcast %cst_35 : f32 to vector<8x2xf32>
    %83 = arith.cmpf ole, %81, %82 : vector<8x2xf32>
    %cst_36 = arith.constant 5.000000e-01 : f32
    %84 = vector.broadcast %cst_36 : f32 to vector<8x2xf32>
    %85 = arith.mulf %84, %80 : vector<8x2xf32>
    %86 = arith.mulf %85, %80 : vector<8x2xf32>
    %cst_37 = arith.constant 5.000000e-01 : f32
    %87 = vector.broadcast %cst_37 : f32 to vector<8x2xf32>
    %88 = arith.subf %81, %87 : vector<8x2xf32>
    %cst_38 = arith.constant 1.000000e+00 : f32
    %89 = vector.broadcast %cst_38 : f32 to vector<8x2xf32>
    %90 = arith.mulf %89, %88 : vector<8x2xf32>
    %91 = arith.select %83, %86, %90 : vector<8x2xi1>, vector<8x2xf32>
    %92 = arith.addf %77, %91 : vector<8x2xf32>
    %93 = vector.broadcast %19 : vector<1x2xf32> to vector<8x2xf32>
    %94 = arith.subf %9, %93 : vector<8x2xf32>
    %95 = arith.select %48, %9, %94 : vector<8x2xi1>, vector<8x2xf32>
    %96 = math.absf %95 : vector<8x2xf32>
    %cst_39 = arith.constant 1.000000e+00 : f32
    %97 = vector.broadcast %cst_39 : f32 to vector<8x2xf32>
    %98 = arith.cmpf ole, %96, %97 : vector<8x2xf32>
    %cst_40 = arith.constant 5.000000e-01 : f32
    %99 = vector.broadcast %cst_40 : f32 to vector<8x2xf32>
    %100 = arith.mulf %99, %95 : vector<8x2xf32>
    %101 = arith.mulf %100, %95 : vector<8x2xf32>
    %cst_41 = arith.constant 5.000000e-01 : f32
    %102 = vector.broadcast %cst_41 : f32 to vector<8x2xf32>
    %103 = arith.subf %96, %102 : vector<8x2xf32>
    %cst_42 = arith.constant 1.000000e+00 : f32
    %104 = vector.broadcast %cst_42 : f32 to vector<8x2xf32>
    %105 = arith.mulf %104, %103 : vector<8x2xf32>
    %106 = arith.select %98, %101, %105 : vector<8x2xi1>, vector<8x2xf32>
    %107 = arith.addf %92, %106 : vector<8x2xf32>
    %108 = math.log %1 : vector<8x2xf32>
    %cst_43 = arith.constant -1.000000e+02 : f32
    %109 = vector.broadcast %cst_43 : f32 to vector<8x2xf32>
    %110 = arith.maximumf %108, %109 : vector<8x2xf32>
    %cst_44 = arith.constant 1.000000e+00 : f32
    %111 = vector.broadcast %cst_44 : f32 to vector<8x2xf32>
    %112 = arith.subf %111, %1 : vector<8x2xf32>
    %113 = math.log %112 : vector<8x2xf32>
    %cst_45 = arith.constant -1.000000e+02 : f32
    %114 = vector.broadcast %cst_45 : f32 to vector<8x2xf32>
    %115 = arith.maximumf %113, %114 : vector<8x2xf32>
    %cst_46 = arith.constant 0.000000e+00 : f32
    %116 = vector.broadcast %cst_46 : f32 to vector<8x2xf32>
    %117 = arith.subf %116, %115 : vector<8x2xf32>
    %118 = vector.broadcast %11 : vector<1x2xf32> to vector<8x2xf32>
    %119 = arith.mulf %118, %110 : vector<8x2xf32>
    %cst_47 = arith.constant 1.000000e+00 : f32
    %120 = vector.broadcast %cst_47 : f32 to vector<1x2xf32>
    %121 = arith.subf %120, %11 : vector<1x2xf32>
    %122 = vector.broadcast %121 : vector<1x2xf32> to vector<8x2xf32>
    %123 = arith.mulf %122, %115 : vector<8x2xf32>
    %124 = arith.addf %119, %123 : vector<8x2xf32>
    %cst_48 = arith.constant 0.000000e+00 : f32
    %125 = vector.broadcast %cst_48 : f32 to vector<8x2xf32>
    %126 = arith.subf %125, %124 : vector<8x2xf32>
    %127 = arith.select %48, %117, %126 : vector<8x2xi1>, vector<8x2xf32>
    %128 = vector.shape_cast %107 : vector<8x2xf32> to vector<1x8x2xf32>
    %cst_49 = arith.constant dense<0.000000e+00> : vector<1xf32>
    %129 = vector.multi_reduction <add>, %128, %cst_49 [1, 2] : vector<1x8x2xf32> to vector<1xf32>
    %130 = vector.shape_cast %129 : vector<1xf32> to vector<1x1x1xf32>
    %131 = vector.extract %130[0, 0, 0] : f32 from vector<1x1x1xf32>
    %132 = vector.shape_cast %127 : vector<8x2xf32> to vector<1x8x2xf32>
    %cst_50 = arith.constant dense<0.000000e+00> : vector<1xf32>
    %133 = vector.multi_reduction <add>, %132, %cst_50 [1, 2] : vector<1x8x2xf32> to vector<1xf32>
    %134 = vector.shape_cast %133 : vector<1xf32> to vector<1x1x1xf32>
    %135 = vector.extract %134[0, 0, 0] : f32 from vector<1x1x1xf32>
    %136 = tpu.iota {dimensions = array<i32: 1>} : vector<1x2x128xi32>
    %c0_i32 = arith.constant 0 : i32
    %137 = vector.broadcast %c0_i32 : i32 to vector<1x2x128xi32>
    %138 = arith.cmpi eq, %136, %137 : vector<1x2x128xi32>
    %139 = vector.broadcast %131 : f32 to vector<1x2x128xf32>
    %140 = vector.broadcast %135 : f32 to vector<1x2x128xf32>
    %141 = arith.select %138, %139, %140 : vector<1x2x128xi1>, vector<1x2x128xf32>
    %c0_51 = arith.constant 0 : index
    %c0_52 = arith.constant 0 : index
    %c0_53 = arith.constant 0 : index
    %142 = vector.load %arg3[%c0_51, %c0_52, %c0_53] : memref<1x2x128xf32, #tpu.memory_space<vmem>>, vector<1x2x128xf32>
    tpu.vector_store %arg3[%c0_51, %c0_52, %c0_53], %141 {strides = array<i32>} : memref<1x2x128xf32, #tpu.memory_space<vmem>>, vector<1x2x128xf32>,
    return
  }
  func.func @transform_0(%arg0: i32) -> (i32, i32, i32) {
    %c0_i32 = arith.constant 0 : i32
    %c0_i32_0 = arith.constant 0 : i32
    %c0_i32_1 = arith.constant 0 : i32
    return %c0_i32, %c0_i32_0, %arg0 : i32, i32, i32
  }
  func.func @transform_1(%arg0: i32) -> (i32, i32, i32) {
    %c0_i32 = arith.constant 0 : i32
    %c0_i32_0 = arith.constant 0 : i32
    %c0_i32_1 = arith.constant 0 : i32
    return %c0_i32, %c0_i32_0, %arg0 : i32, i32, i32
  }
  func.func @transform_2(%arg0: i32) -> (i32, i32, i32) {
    %c0_i32 = arith.constant 0 : i32
    %c0_i32_0 = arith.constant 0 : i32
    %c0_i32_1 = arith.constant 0 : i32
    return %arg0, %c0_i32, %c0_i32_0 : i32, i32, i32
  }
}

</mosaic_0001>

<llo_original>
// kernel: tpu_custom_call.1
$region0: #{tpu_custom_call.1}
  #allocation0 [shape = 'u32[]', space=smem, size = 0x4, offset = 0x4, fixed_abs, tag = 'smem constant byte address 0x4 - core index']
  #allocation1 [shape = 'u32[144,128]{1,0:T(1,128)}', space=vmem, size = 0x12000, scoped, tag = 'internal scratch']
  %s0 = inlined_call_operand.vmem [shape: f32[5,8,2], index: 0, kind: input, shape index: {}]
  %s1 = inlined_call_operand.vmem [shape: f32[5,1,2], index: 1, kind: input, shape index: {}]
  %s2 = inlined_call_operand.hbm [shape: f32[1,2,128], index: 2, kind: output, shape index: {}]
  %s3 = sld [smem:[#allocation0]]
  $region18: #{tpu_custom_call.1} parent=0
    _
  %s5 = ssub.s32 1, %s3
  %s6 = scalar_select 0, %s5, %s3
  $region1: #{tpu_custom_call.1} parent=0
    #allocation2 [shape = 'u8[1024]{0}', space=vmem, size = 0x400, scoped, tag = 'output window, operand 0, single buffered']
    #allocation3 [shape = 's32[1]{0}', space=sflag, size = 0x4, scoped, tag = 'scoped memory for tpu_custom_call.1']
    %7 = vsyncpa [#allocation3], 0
    // Predicated region
    $region2: #{tpu_custom_call.1} parent=1 // pred_check
      _
    $region3: #{tpu_custom_call.1} parent=1 // pred_check_branch
      %9 = sbr.rel (0) target = $region5
    $region4: #{tpu_custom_call.1} parent=1 // pred_region
      _
    $region5: #{tpu_custom_call.1} parent=1 // pred_fallthru
      _
    // Predicated region
    $region6: #{tpu_custom_call.1} parent=1 // pred_check
      _
    $region7: #{tpu_custom_call.1} parent=1 // pred_check_branch
      %11 = sbr.rel (0) target = $region9
    $region8: #{tpu_custom_call.1} parent=1 // pred_region
      _
    $region9: #{tpu_custom_call.1} parent=1 // pred_fallthru
      _
    %v12 = vld [vmem:[%s0] sm:$0xff]
    %s13 = scalar_lea.vmem %s0, 8
    %v14 = vld [vmem:[%s13] sm:$0xff]
    %s15 = scalar_lea.vmem %s0, 16
    %v16 = vld [vmem:[%s15] sm:$0xff]
    %s17 = scalar_lea.vmem %s0, 24
    %v18 = vld [vmem:[%s17] sm:$0xff]
    %s19 = scalar_lea.vmem %s0, 32
    %v20 = vld [vmem:[%s19] sm:$0xff]
    %v21 = vld [vmem:[%s1] sm:$0x1]
    %s22 = scalar_lea.vmem %s1, 1
    %v23 = vld [vmem:[%s22] sm:$0x1]
    %s24 = scalar_lea.vmem %s1, 2
    %v25 = vld [vmem:[%s24] sm:$0x1]
    %s26 = scalar_lea.vmem %s1, 3
    %v27 = vld [vmem:[%s26] sm:$0x1]
    %s28 = scalar_lea.vmem %s1, 4
    %v29 = vld [vmem:[%s28] sm:$0x1]
    %v31 = vlaneseq
    %v32 = vshrl.u32 %v31, 7
    %v33 = vsub.s32 0, %v32
    %v34 = vrot.slane %v23, %v33
    %v36 = vmax.f32 %v14, %v34
    %v38 = vlaneseq
    %v39 = vshrl.u32 %v38, 7
    %v40 = vsub.s32 0, %v39
    %v41 = vrot.slane %v25, %v40
    %v43 = vmax.f32 %v16, %v41
    %v44 = vadd.f32 %v14, %v18
    %v45 = vadd.f32 %v23, %v27
    %v47 = vlaneseq
    %v48 = vshrl.u32 %v47, 7
    %v49 = vsub.s32 0, %v48
    %v50 = vrot.slane %v45, %v49
    %v52 = vmin.f32 %v44, %v50
    %v53 = vadd.f32 %v16, %v20
    %v54 = vadd.f32 %v25, %v29
    %v56 = vlaneseq
    %v57 = vshrl.u32 %v56, 7
    %v58 = vsub.s32 0, %v57
    %v59 = vrot.slane %v54, %v58
    %v61 = vmin.f32 %v53, %v59
    %v62 = vsub.f32 %v52, %v36
    %v63 = vsub.f32 %v61, %v43
    %v64 = vmul.f32 %v62, %v63
    %v65 = vmul.f32 %v18, %v20
    %v66 = vmul.f32 %v27, %v29
    %v68 = vlaneseq
    %v69 = vshrl.u32 %v68, 7
    %v70 = vsub.s32 0, %v69
    %v71 = vrot.slane %v66, %v70
    %v73 = vadd.f32 %v65, %v71
    %v74 = vsub.f32 %v73, %v64
    %v75 = vrcp.pop %v74
    %v76 = vmul.f32 %v64, %v75
    %vm77 = vcmp.lt.f32.partialorder %v52, %v36
    %v78 = vsel %vm77, 0.0, %v76
    %vm79 = vcmp.lt.f32.partialorder %v61, %v43
    %v80 = vsel %vm79, 0.0, %v78
    %vm81 = vcmp.lt.f32.partialorder %v80, 0.5
    %v82 = vsub.f32 %v14, %v34
    %v83 = vsel %vm81, %v14, %v82
    %v84 = vand.u32 2147483647, %v83
    %vm85 = vcmp.le.f32.partialorder %v84, 1.0
    %v86 = vmul.f32 %v83, 0.5
    %v87 = vmul.f32 %v86, %v83
    %v88 = vsub.f32 %v84, 0.5
    %v89 = vsel %vm85, %v87, %v88
    %v90 = vsub.f32 %v16, %v41
    %v91 = vsel %vm81, %v16, %v90
    %v92 = vand.u32 2147483647, %v91
    %vm93 = vcmp.le.f32.partialorder %v92, 1.0
    %v94 = vmul.f32 %v91, 0.5
    %v95 = vmul.f32 %v94, %v91
    %v96 = vsub.f32 %v92, 0.5
    %v97 = vsel %vm93, %v95, %v96
    %v98 = vadd.f32 %v89, %v97
    %v100 = vlaneseq
    %v101 = vshrl.u32 %v100, 7
    %v102 = vsub.s32 0, %v101
    %v103 = vrot.slane %v27, %v102
    %v105 = vsub.f32 %v18, %v103
    %v106 = vsel %vm81, %v18, %v105
    %v107 = vand.u32 2147483647, %v106
    %vm108 = vcmp.le.f32.partialorder %v107, 1.0
    %v109 = vmul.f32 %v106, 0.5
    %v110 = vmul.f32 %v109, %v106
    %v111 = vsub.f32 %v107, 0.5
    %v112 = vsel %vm108, %v110, %v111
    %v113 = vadd.f32 %v98, %v112
    %v115 = vlaneseq
    %v116 = vshrl.u32 %v115, 7
    %v117 = vsub.s32 0, %v116
    %v118 = vrot.slane %v29, %v117
    %v120 = vsub.f32 %v20, %v118
    %v121 = vsel %vm81, %v20, %v120
    %v122 = vand.u32 2147483647, %v121
    %vm123 = vcmp.le.f32.partialorder %v122, 1.0
    %v124 = vmul.f32 %v121, 0.5
    %v125 = vmul.f32 %v124, %v121
    %v126 = vsub.f32 %v122, 0.5
    %v127 = vsel %vm123, %v125, %v126
    %v128 = vadd.f32 %v113, %v127
    %v129 = vlog2.pop %v12
    %v130 = vmul.f32 %v129, 0.6931472
    %v131 = vmax.f32 %v130, -100.0
    %v132 = vsub.f32 1.0, %v12
    %v133 = vlog2.pop %v132
    %v134 = vmul.f32 %v133, 0.6931472
    %v135 = vmax.f32 %v134, -100.0
    %v136 = vsub.f32 0.0, %v135
    %v138 = vlaneseq
    %v139 = vshrl.u32 %v138, 7
    %v140 = vsub.s32 0, %v139
    %v141 = vrot.slane %v21, %v140
    %v143 = vmul.f32 %v141, %v131
    %v144 = vsub.f32 1.0, %v21
    %v146 = vlaneseq
    %v147 = vshrl.u32 %v146, 7
    %v148 = vsub.s32 0, %v147
    %v149 = vrot.slane %v144, %v148
    %v151 = vmul.f32 %v149, %v135
    %v152 = vadd.f32 %v143, %v151
    %v153 = vsub.f32 0.0, %v152
    %v154 = vsel %vm81, %v136, %v153
    %vm155 = vcmask 15360
    %v156 = vsel %vm155, %v128, 0.0
    %157 = vadd.xlane.f32.xlu0 %v156
    %v158 = vpop.xlane.xlu0 %157
    %v159 = vrot.slane %v158, 4
    %v160 = vadd.f32 %v158, %v159
    %v161 = vrot.slane %v160, 2
    %v162 = vadd.f32 %v160, %v161
    %v163 = vrot.slane %v162, 1
    %v164 = vadd.f32 %v162, %v163
    %s165 = vtos %v164
    %v166 = vsel %vm155, %v154, 0.0
    %167 = vadd.xlane.f32.xlu0 %v166
    %v168 = vpop.xlane.xlu0 %167
    %v169 = vrot.slane %v168, 4
    %v170 = vadd.f32 %v168, %v169
    %v171 = vrot.slane %v170, 2
    %v172 = vadd.f32 %v170, %v171
    %v173 = vrot.slane %v172, 1
    %v174 = vadd.f32 %v172, %v173
    %s175 = vtos %v174
    %v176 = vlaneseq
    %v177 = vshrl.u32 %v176, 7
    %vm178 = vcmp.eq.s32.totalorder %v177, 0
    %v179 = vstv %s165
    %v180 = vstv %s175
    %v181 = vsel %vm178, %v179, %v180
    %182 = vst [vmem:[#allocation2] sm:$0x3] %v181
    // Predicated region
    $region10: #{tpu_custom_call.1} parent=1 // pred_check
      _
    $region11: #{tpu_custom_call.1} parent=1 // pred_check_branch
      %184 = sbr.rel (0) target = $region13
    $region12: #{tpu_custom_call.1} parent=1 // pred_region
      %s186 = ssub.s32 32, 32
      %187 = vsyncadd [#allocation3], %s186
      %s189 = sshll.u32 [#allocation2], 4
      %s190 = int_to_ptr.vmem [resolvable:$true] %s189
      %192 = dma.vmem_to_hbm [thread:$0]  %s190, 32, %s2, [#allocation3]
    $region13: #{tpu_custom_call.1} parent=1 // pred_fallthru
      _
    // Predicated region
    $region14: #{tpu_custom_call.1} parent=1 // pred_check
      _
    $region15: #{tpu_custom_call.1} parent=1 // pred_check_branch
      %194 = sbr.rel (0) target = $region17
    $region16: #{tpu_custom_call.1} parent=1 // pred_region
      %195 = dma.done [#allocation3], 32
    $region17: #{tpu_custom_call.1} parent=1 // pred_fallthru
      _
    %196 = vsyncpa [#allocation3], 1

</llo_original>
